<compile_context>
chip_gen: v6e
topology: v6e:2x2x1
jax: 0.10.0
libtpu: 0.0.40
codegen_flags: <defaults>
</compile_context>

<pallas_src>
import functools

import jax
import jax.numpy as jnp
from jax.experimental import pallas as pl
from jax.experimental.pallas import tpu as pltpu


def _round_up(x: int, m: int) -> int:
    return (x + m - 1) // m * m


_MAX_TILE_D = 4096     # per-step footprint at 4096 lanes is a few MB -> far below VMEM limits
_MIN_SPLIT_TILE = 512  # don't shrink tiles below this just to feed a second TensorCore


def _num_tensorcores() -> int:
    """Best-effort TensorCore count of the local device (2 on v7x, else 1)."""
    try:
        dev = jax.devices()[0]
    except Exception:
        return 1
    n = getattr(dev, "num_cores", None)
    if isinstance(n, int) and 1 <= n <= 8:
        return n
    kind = str(getattr(dev, "device_kind", "")).lower()
    return 2 if ("v7" in kind or "tpu7" in kind) else 1


def _preferred_pointwise_dtype() -> str:
    """bf16 pointwise chain on v6e/v7x (bf16 EUP/VPU); f32 on v5e and older."""
    try:
        kind = str(jax.devices()[0].device_kind).lower()
    except Exception:
        return "float32"
    for old in ("v2", "v3", "v4", "v5"):
        if old in kind:
            return "float32"
    return "bfloat16"


def _choose_tiling(d: int) -> tuple[int, int]:
    """Returns (TILE_D, D_pad): balanced 128-aligned tiles, >= num_cores tiles on
    multi-TC chips when there is enough data to split."""
    d128 = _round_up(max(d, 1), 128)
    n = pl.cdiv(d128, _MAX_TILE_D)
    cores = _num_tensorcores()
    if cores > 1 and d128 >= cores * _MIN_SPLIT_TILE:
        n = _round_up(max(n, cores), cores)
    tile = _round_up(pl.cdiv(d128, n), 128)
    return tile, n * tile


def _spectral_filter_kernel(
    x_re_ref, x_im_ref,
    w1t_ref, b1_ref, w2t_ref, b2_ref, w3t_ref, b3_ref,
    y2_ref, ljd_ref,
    *, split_size: int, compute_dtype,
):
    # Lane axis = series index (TILE_D), sublane axis = frequency bins / hidden units.
    cd = compute_dtype
    x_re = x_re_ref[...]                                     # (S, TILE_D) f32
    x_im = x_im_ref[...]                                     # (S, TILE_D) f32

    # Fused H/M MLP, weights pre-transposed & block-diagonalized: z = W^T @ x + b.
    # Matmuls accumulate in f32; tanh chain runs in `cd` (bf16 on v6e/v7x).
    xr = x_re.astype(cd)
    z1 = jnp.dot(w1t_ref[...], xr, preferred_element_type=jnp.float32) + b1_ref[...]
    a1 = jnp.tanh(z1.astype(cd))                             # (2H, TILE_D)
    z2 = jnp.dot(w2t_ref[...], a1, preferred_element_type=jnp.float32) + b2_ref[...]
    a2 = jnp.tanh(z2.astype(cd))                             # (2H, TILE_D)
    z3 = jnp.dot(w3t_ref[...], a2, preferred_element_type=jnp.float32) + b3_ref[...]
    a3 = jnp.tanh(z3.astype(cd))                             # (2*S_pad, TILE_D)

    S = split_size
    S_pad = w3t_ref.shape[0] // 2
    h_ = a3[0:S, :]                      # H_net output rows (sublane-aligned start)
    M = a3[S_pad:S_pad + S, :]           # M_net output rows (sublane-aligned start)

    # softplus; h_ in [-1, 1] after tanh so exp() cannot overflow.
    H = jnp.log1p(jnp.exp(h_))
    H_f32 = H.astype(jnp.float32)

    # y2 combine and log-jacobian accumulation kept in f32.
    y2_ref[...] = H_f32 * x_im + M.astype(jnp.float32)
    ljd_ref[...] = jnp.sum(jnp.log(H_f32), axis=0, keepdims=True)   # (1, TILE_D)


def init_params(key, split_size: int, hidden_dim: int, dtype=jnp.float32):
    """Deterministic PyTorch-Linear-style init. Weights stored as (in, out)."""
    def linear(k, fan_in, fan_out):
        kw, kb = jax.random.split(k)
        bound = 1.0 / jnp.sqrt(fan_in)
        w = jax.random.uniform(kw, (fan_in, fan_out), dtype, -bound, bound)
        b = jax.random.uniform(kb, (1, fan_out), dtype, -bound, bound)
        return w, b

    keys = jax.random.split(key, 6)
    wh1, bh1 = linear(keys[0], split_size, hidden_dim)
    wh2, bh2 = linear(keys[1], hidden_dim, hidden_dim)
    wh3, bh3 = linear(keys[2], hidden_dim, split_size)
    wm1, bm1 = linear(keys[3], split_size, hidden_dim)
    wm2, bm2 = linear(keys[4], hidden_dim, hidden_dim)
    wm3, bm3 = linear(keys[5], hidden_dim, split_size)
    return (wh1, bh1, wh2, bh2, wh3, bh3,
            wm1, bm1, wm2, bm2, wm3, bm3)


def pack_params(params, split_size: int):
    """Fuse H_net/M_net into one transposed matmul chain for the kernel.

    Returns (w1t, b1, w2t, b2, w3t, b3) with shapes
      (2H, S), (2H, 1), (2H, 2H), (2H, 1), (2*S_pad, 2H), (2*S_pad, 1).
    """
    (wh1, bh1, wh2, bh2, wh3, bh3,
     wm1, bm1, wm2, bm2, wm3, bm3) = params
    Hd = wh1.shape[1]
    S = split_size
    S_pad = _round_up(S, 8)

    # Layer 1: both nets consume x_re -> concatenate outputs.
    w1t = jnp.concatenate([wh1, wm1], axis=1).T               # (2H, S)
    b1 = jnp.concatenate([bh1, bm1], axis=1).T                # (2H, 1)

    # Layer 2: block-diagonal.
    zeros_hh = jnp.zeros((Hd, Hd), wh2.dtype)
    w2 = jnp.block([[wh2, zeros_hh], [zeros_hh, wm2]])        # (2H, 2H) in (in, out)
    w2t = w2.T                                                # (2H, 2H)
    b2 = jnp.concatenate([bh2, bm2], axis=1).T                # (2H, 1)

    # Layer 3: block-diagonal with sublane-aligned output halves.
    w3t = jnp.zeros((2 * S_pad, 2 * Hd), wh3.dtype)
    w3t = w3t.at[0:S, 0:Hd].set(wh3.T)
    w3t = w3t.at[S_pad:S_pad + S, Hd:2 * Hd].set(wm3.T)
    b3 = jnp.zeros((2 * S_pad, 1), bh3.dtype)
    b3 = b3.at[0:S, :].set(bh3.T)
    b3 = b3.at[S_pad:S_pad + S, :].set(bm3.T)

    return (w1t, b1, w2t, b2, w3t, b3)


_COMPUTE_DTYPES = {"float32": jnp.float32, "bfloat16": jnp.bfloat16}


@functools.partial(jax.jit, static_argnames=("compute_dtype",))
def spectral_filtering_forward_planar(x_re_t, x_im_t, packed_params,
                                      compute_dtype: str = "float32"):
    """Planar, zero-layout-pass entry point.

    x_re_t, x_im_t: (S, D) lane-dense f32 (series index on lanes).
    Returns (y2_t: (S, D) f32, log_jac_det: (D,) f32).  y1 == x_re_t (caller keeps it).
    """
    S, D = x_re_t.shape
    cd = _COMPUTE_DTYPES[compute_dtype]
    w1t, b1, w2t, b2, w3t, b3 = packed_params
    H2 = w1t.shape[0]          # 2 * hidden_dim
    S_pad2 = w3t.shape[0]      # 2 * S_pad

    TILE_D, D_pad = _choose_tiling(D)
    pad = D_pad - D
    if pad:
        x_re_t = jnp.pad(x_re_t, ((0, 0), (0, pad)))
        x_im_t = jnp.pad(x_im_t, ((0, 0), (0, pad)))

    # Cast the (tiny) weight matrices once; biases stay f32 (added to f32 accum).
    w1c, w2c, w3c = w1t.astype(cd), w2t.astype(cd), w3t.astype(cd)

    data_spec = pl.BlockSpec((S, TILE_D), lambda i: (0, i))
    ljd_spec = pl.BlockSpec((1, TILE_D), lambda i: (0, i))

    def resident(arr):
        # Full-array block with a constant index map: DMA'd once, stays in VMEM.
        return pl.BlockSpec(arr.shape, lambda i: (0, 0))

    flops = 2 * D_pad * (H2 * S + H2 * H2 + S_pad2 * H2) + 6 * D_pad * S
    transcendentals = D_pad * (2 * H2 + S_pad2 + 2 * S)
    bytes_accessed = 4 * ((3 * S + 1) * D_pad) + 4 * sum(
        int(p.size) for p in packed_params)

    kernel = functools.partial(_spectral_filter_kernel,
                               split_size=S, compute_dtype=cd)

    y2_t, ljd_t = pl.pallas_call(
        kernel,
        out_shape=(
            jax.ShapeDtypeStruct((S, D_pad), jnp.float32),
            jax.ShapeDtypeStruct((1, D_pad), jnp.float32),
        ),
        grid=(D_pad // TILE_D,),
        in_specs=[
            data_spec, data_spec,
            resident(w1c), resident(b1),
            resident(w2c), resident(b2),
            resident(w3c), resident(b3),
        ],
        out_specs=(data_spec, ljd_spec),
        compiler_params=pltpu.CompilerParams(
            dimension_semantics=("parallel",)),
        cost_estimate=pl.CostEstimate(
            flops=flops,
            transcendentals=transcendentals,
            bytes_accessed=bytes_accessed),
    )(x_re_t, x_im_t, w1c, b1, w2c, b2, w3c, b3)

    if pad:
        y2_t = y2_t[:, :D]
        ljd = ljd_t[0, :D]
    else:
        ljd = ljd_t[0, :]
    return y2_t, ljd


@functools.partial(jax.jit, static_argnames=("flip", "compute_dtype"))
def spectral_filtering_forward(x, packed_params, flip: bool,
                               compute_dtype: str = "float32"):
    """PyTorch-interface wrapper: x (D, split_size, 2) -> (Y (D, S, 2), ljd (D,)).

    The slice/transpose/stack layout ops live inside this jit so XLA fuses them
    with producer/consumer; for layout-free operation call the planar entry point.
    """
    x_re, x_im = x[:, :, 0], x[:, :, 1]
    if flip:
        x_re, x_im = x_im, x_re

    y2_t, ljd = spectral_filtering_forward_planar(
        x_re.T, x_im.T, packed_params, compute_dtype=compute_dtype)

    y2 = y2_t.T                          # (D, S)
    y1 = x_re                            # pass-through: never touched the kernel
    if flip:
        Y = jnp.stack([y2, y1], axis=-1)
    else:
        Y = jnp.stack([y1, y2], axis=-1)
    return Y, ljd


def _reference_forward(x, params, flip: bool):
    """Pure-JAX reference mirroring the PyTorch module (raw per-layer params)."""
    (wh1, bh1, wh2, bh2, wh3, bh3,
     wm1, bm1, wm2, bm2, wm3, bm3) = params
    x_re, x_im = x[:, :, 0], x[:, :, 1]
    if flip:
        x_re, x_im = x_im, x_re
    h = jnp.tanh(x_re @ wh1 + bh1)
    h = jnp.tanh(h @ wh2 + bh2)
    h_ = jnp.tanh(h @ wh3 + bh3)
    H = jax.nn.softplus(h_)
    m = jnp.tanh(x_re @ wm1 + bm1)
    m = jnp.tanh(m @ wm2 + bm2)
    M = jnp.tanh(m @ wm3 + bm3)
    y1 = x_re
    y2 = H * x_im + M
    if flip:
        y2, y1 = y1, y2
    Y = jnp.stack([y1, y2], axis=-1)
    ljd = jnp.sum(jnp.log(H), axis=-1)
    return Y, ljd


if __name__ == "__main__":
    seq_len = 16
    hidden_dim = 32
    split_size = seq_len // 2 + 1           # 9

    key = jax.random.PRNGKey(0)
    k_param, k_x1, k_x2 = jax.random.split(key, 3)
    params = init_params(k_param, split_size, hidden_dim)
    packed = pack_params(params, split_size)

    ok = True

    # f32 path: strict check on every chip generation; two D sizes exercise the
    # single-tile and padded-tile code paths.
    for D, kx in ((8, k_x1), (300, k_x2)):
        x = jax.random.normal(kx, (D, split_size, 2), dtype=jnp.float32)
        for flip in (False, True):
            Y, ljd = spectral_filtering_forward(x, packed, flip,
                                                compute_dtype="float32")
            jax.block_until_ready((Y, ljd))
            Y_ref, ljd_ref = _reference_forward(x, params, flip)
            ok &= bool(jnp.allclose(Y, Y_ref, atol=1e-5, rtol=1e-5))
            ok &= bool(jnp.allclose(ljd, ljd_ref, atol=1e-5, rtol=1e-5))

    # Device-preferred pointwise dtype (bf16 on v6e/v7x only); looser tolerance
    # against the f32 reference per the review's correctness note.
    cd = _preferred_pointwise_dtype()
    if cd != "float32":
        x = jax.random.normal(k_x1, (8, split_size, 2), dtype=jnp.float32)
        Y, ljd = spectral_filtering_forward(x, packed, False, compute_dtype=cd)
        jax.block_until_ready((Y, ljd))
        Y_ref, ljd_ref = _reference_forward(x, params, False)
        ok &= bool(jnp.allclose(Y, Y_ref, atol=1e-1, rtol=5e-2))
        ok &= bool(jnp.allclose(ljd, ljd_ref, atol=3e-1, rtol=5e-2))

    if ok:
        print("KERNEL_OK")
    else:
        print("KERNEL_MISMATCH")
</pallas_src>

<mosaic_0001>
module attributes {stable_mosaic.version = 11 : i64} {
  func.func @_spectral_filter_kernel(%arg0: i32, %arg1: memref<9x128xf32, #tpu.memory_space<vmem>>, %arg2: memref<9x128xf32, #tpu.memory_space<vmem>>, %arg3: memref<64x9xf32, #tpu.memory_space<vmem>>, %arg4: memref<64x1xf32, #tpu.memory_space<vmem>>, %arg5: memref<64x64xf32, #tpu.memory_space<vmem>>, %arg6: memref<64x1xf32, #tpu.memory_space<vmem>>, %arg7: memref<32x64xf32, #tpu.memory_space<vmem>>, %arg8: memref<32x1xf32, #tpu.memory_space<vmem>>, %arg9: memref<9x128xf32, #tpu.memory_space<vmem>>, %arg10: memref<1x128xf32, #tpu.memory_space<vmem>>) attributes {dimension_semantics = [#tpu.dimension_semantics<parallel>], iteration_bounds = array<i64: 1>, scalar_prefetch = 0 : i64, scratch_operands = 0 : i64, tpu.core_type = #tpu.core_type<tc>, window_params = [{transform_indices = @transform_0, window_bounds = array<i64: 9, 128>}, {transform_indices = @transform_1, window_bounds = array<i64: 9, 128>}, {pipeline_mode = #tpu.pipeline_mode<synchronous>, transform_indices = @transform_2, window_bounds = array<i64: 64, 9>}, {pipeline_mode = #tpu.pipeline_mode<synchronous>, transform_indices = @transform_3, window_bounds = array<i64: 64, 1>}, {pipeline_mode = #tpu.pipeline_mode<synchronous>, transform_indices = @transform_4, window_bounds = array<i64: 64, 64>}, {pipeline_mode = #tpu.pipeline_mode<synchronous>, transform_indices = @transform_5, window_bounds = array<i64: 64, 1>}, {pipeline_mode = #tpu.pipeline_mode<synchronous>, transform_indices = @transform_6, window_bounds = array<i64: 32, 64>}, {pipeline_mode = #tpu.pipeline_mode<synchronous>, transform_indices = @transform_7, window_bounds = array<i64: 32, 1>}, {transform_indices = @transform_8, window_bounds = array<i64: 9, 128>}, {transform_indices = @transform_9, window_bounds = array<i64: 1, 128>}]} {
    %c0 = arith.constant 0 : index
    %c0_0 = arith.constant 0 : index
    %0 = vector.load %arg1[%c0, %c0_0] : memref<9x128xf32, #tpu.memory_space<vmem>>, vector<9x128xf32>
    %c0_1 = arith.constant 0 : index
    %c0_2 = arith.constant 0 : index
    %1 = vector.load %arg2[%c0_1, %c0_2] : memref<9x128xf32, #tpu.memory_space<vmem>>, vector<9x128xf32>
    %c0_3 = arith.constant 0 : index
    %c0_4 = arith.constant 0 : index
    %2 = vector.load %arg3[%c0_3, %c0_4] : memref<64x9xf32, #tpu.memory_space<vmem>>, vector<64x9xf32>
    %cst = arith.constant dense<0.000000e+00> : vector<64x128xf32>
    %3 = tpu.matmul %2, %0, %cst {dimension_numbers = #tpu.dot_dimension_numbers<[1], [0], [0], [1], [0, 0, 1, 1], [], []>} : vector<64x9xf32>, vector<9x128xf32>, vector<64x128xf32> -> vector<64x128xf32>
    %c0_5 = arith.constant 0 : index
    %c0_6 = arith.constant 0 : index
    %4 = vector.load %arg4[%c0_5, %c0_6] : memref<64x1xf32, #tpu.memory_space<vmem>>, vector<64x1xf32>
    %5 = vector.broadcast %4 : vector<64x1xf32> to vector<64x128xf32>
    %6 = arith.addf %3, %5 : vector<64x128xf32>
    %7 = math.tanh %6 : vector<64x128xf32>
    %c0_7 = arith.constant 0 : index
    %c0_8 = arith.constant 0 : index
    %8 = vector.load %arg5[%c0_7, %c0_8] : memref<64x64xf32, #tpu.memory_space<vmem>>, vector<64x64xf32>
    %cst_9 = arith.constant dense<0.000000e+00> : vector<64x128xf32>
    %9 = tpu.matmul %8, %7, %cst_9 {dimension_numbers = #tpu.dot_dimension_numbers<[1], [0], [0], [1], [0, 0, 1, 1], [], []>} : vector<64x64xf32>, vector<64x128xf32>, vector<64x128xf32> -> vector<64x128xf32>
    %c0_10 = arith.constant 0 : index
    %c0_11 = arith.constant 0 : index
    %10 = vector.load %arg6[%c0_10, %c0_11] : memref<64x1xf32, #tpu.memory_space<vmem>>, vector<64x1xf32>
    %11 = vector.broadcast %10 : vector<64x1xf32> to vector<64x128xf32>
    %12 = arith.addf %9, %11 : vector<64x128xf32>
    %13 = math.tanh %12 : vector<64x128xf32>
    %c0_12 = arith.constant 0 : index
    %c0_13 = arith.constant 0 : index
    %14 = vector.load %arg7[%c0_12, %c0_13] : memref<32x64xf32, #tpu.memory_space<vmem>>, vector<32x64xf32>
    %cst_14 = arith.constant dense<0.000000e+00> : vector<32x128xf32>
    %15 = tpu.matmul %14, %13, %cst_14 {dimension_numbers = #tpu.dot_dimension_numbers<[1], [0], [0], [1], [0, 0, 1, 1], [], []>} : vector<32x64xf32>, vector<64x128xf32>, vector<32x128xf32> -> vector<32x128xf32>
    %c0_15 = arith.constant 0 : index
    %c0_16 = arith.constant 0 : index
    %16 = vector.load %arg8[%c0_15, %c0_16] : memref<32x1xf32, #tpu.memory_space<vmem>>, vector<32x1xf32>
    %17 = vector.broadcast %16 : vector<32x1xf32> to vector<32x128xf32>
    %18 = arith.addf %15, %17 : vector<32x128xf32>
    %19 = math.tanh %18 : vector<32x128xf32>
    %20 = vector.extract_strided_slice %19 {offsets = [0, 0], sizes = [9, 128], strides = [1, 1]} : vector<32x128xf32> to vector<9x128xf32>
    %21 = vector.extract_strided_slice %19 {offsets = [16, 0], sizes = [9, 128], strides = [1, 1]} : vector<32x128xf32> to vector<9x128xf32>
    %22 = math.exp %20 : vector<9x128xf32>
    %23 = math.log1p %22 : vector<9x128xf32>
    %24 = arith.mulf %23, %1 : vector<9x128xf32>
    %25 = arith.addf %24, %21 : vector<9x128xf32>
    %c0_17 = arith.constant 0 : index
    %c0_18 = arith.constant 0 : index
    %26 = vector.load %arg9[%c0_17, %c0_18] : memref<9x128xf32, #tpu.memory_space<vmem>>, vector<9x128xf32>
    tpu.vector_store %arg9[%c0_17, %c0_18], %25 {strides = array<i32>} : memref<9x128xf32, #tpu.memory_space<vmem>>, vector<9x128xf32>,
    %27 = math.log %23 : vector<9x128xf32>
    %cst_19 = arith.constant dense<0.000000e+00> : vector<128xf32>
    %28 = vector.multi_reduction <add>, %27, %cst_19 [0] : vector<9x128xf32> to vector<128xf32>
    %29 = vector.shape_cast %28 : vector<128xf32> to vector<1x128xf32>
    %c0_20 = arith.constant 0 : index
    %c0_21 = arith.constant 0 : index
    %30 = vector.load %arg10[%c0_20, %c0_21] : memref<1x128xf32, #tpu.memory_space<vmem>>, vector<1x128xf32>
    tpu.vector_store %arg10[%c0_20, %c0_21], %29 {strides = array<i32>} : memref<1x128xf32, #tpu.memory_space<vmem>>, vector<1x128xf32>,
    return
  }
  func.func @transform_0(%arg0: i32) -> (i32, i32) {
    %c0_i32 = arith.constant 0 : i32
    %c0_i32_0 = arith.constant 0 : i32
    return %c0_i32, %arg0 : i32, i32
  }
  func.func @transform_1(%arg0: i32) -> (i32, i32) {
    %c0_i32 = arith.constant 0 : i32
    %c0_i32_0 = arith.constant 0 : i32
    return %c0_i32, %arg0 : i32, i32
  }
  func.func @transform_2(%arg0: i32) -> (i32, i32) {
    %c0_i32 = arith.constant 0 : i32
    %c0_i32_0 = arith.constant 0 : i32
    %c0_i32_1 = arith.constant 0 : i32
    return %c0_i32, %c0_i32_0 : i32, i32
  }
  func.func @transform_3(%arg0: i32) -> (i32, i32) {
    %c0_i32 = arith.constant 0 : i32
    %c0_i32_0 = arith.constant 0 : i32
    %c0_i32_1 = arith.constant 0 : i32
    return %c0_i32, %c0_i32_0 : i32, i32
  }
  func.func @transform_4(%arg0: i32) -> (i32, i32) {
    %c0_i32 = arith.constant 0 : i32
    %c0_i32_0 = arith.constant 0 : i32
    %c0_i32_1 = arith.constant 0 : i32
    return %c0_i32, %c0_i32_0 : i32, i32
  }
  func.func @transform_5(%arg0: i32) -> (i32, i32) {
    %c0_i32 = arith.constant 0 : i32
    %c0_i32_0 = arith.constant 0 : i32
    %c0_i32_1 = arith.constant 0 : i32
    return %c0_i32, %c0_i32_0 : i32, i32
  }
  func.func @transform_6(%arg0: i32) -> (i32, i32) {
    %c0_i32 = arith.constant 0 : i32
    %c0_i32_0 = arith.constant 0 : i32
    %c0_i32_1 = arith.constant 0 : i32
    return %c0_i32, %c0_i32_0 : i32, i32
  }
  func.func @transform_7(%arg0: i32) -> (i32, i32) {
    %c0_i32 = arith.constant 0 : i32
    %c0_i32_0 = arith.constant 0 : i32
    %c0_i32_1 = arith.constant 0 : i32
    return %c0_i32, %c0_i32_0 : i32, i32
  }
  func.func @transform_8(%arg0: i32) -> (i32, i32) {
    %c0_i32 = arith.constant 0 : i32
    %c0_i32_0 = arith.constant 0 : i32
    return %c0_i32, %arg0 : i32, i32
  }
  func.func @transform_9(%arg0: i32) -> (i32, i32) {
    %c0_i32 = arith.constant 0 : i32
    %c0_i32_0 = arith.constant 0 : i32
    return %c0_i32, %arg0 : i32, i32
  }
}

</mosaic_0001>

<llo_original>
// kernel: spectral_filtering_forward_planar.1
$region0: #{spectral_filtering_forward_planar.1}
  #allocation0 [shape = 'u32[]', space=smem, size = 0x4, offset = 0x4, fixed_abs, tag = 'smem constant byte address 0x4 - core index']
  #allocation1 [shape = 'u32[144,128]{1,0:T(1,128)}', space=vmem, size = 0x12000, scoped, tag = 'internal scratch']
  %s0 = inlined_call_operand.vmem [shape: f32[9,128], index: 0, kind: input, shape index: {}]
  %s1 = inlined_call_operand.vmem [shape: f32[9,128], index: 1, kind: input, shape index: {}]
  %s2 = inlined_call_operand.vmem [shape: f32[64,9], index: 2, kind: input, shape index: {}]
  %s3 = inlined_call_operand.vmem [shape: f32[64,1], index: 3, kind: input, shape index: {}]
  %s4 = inlined_call_operand.vmem [shape: f32[64,64], index: 4, kind: input, shape index: {}]
  %s5 = inlined_call_operand.vmem [shape: f32[64,1], index: 5, kind: input, shape index: {}]
  %s6 = inlined_call_operand.vmem [shape: f32[32,64], index: 6, kind: input, shape index: {}]
  %s7 = inlined_call_operand.vmem [shape: f32[32,1], index: 7, kind: input, shape index: {}]
  %s8 = inlined_call_operand.vmem [shape: f32[9,128], index: 8, kind: output, shape index: {0}]
  %s9 = inlined_call_operand.vmem [shape: f32[1,128], index: 9, kind: output, shape index: {1}]
  %10 = xla_tuple %s8, %s9
  %s11 = sld [smem:[#allocation0]]
  $region50: #{spectral_filtering_forward_planar.1} parent=0
    _
  %s13 = ssub.s32 1, %s11
  %s14 = scalar_select 0, %s13, %s11
  // Predicated region
  $region2: #{spectral_filtering_forward_planar.1} parent=0 // pred_check
    _
  $region3: #{spectral_filtering_forward_planar.1} parent=0 // pred_check_branch
    %16 = sbr.rel (0) target = $region5
  $region4: #{spectral_filtering_forward_planar.1} parent=0 // pred_region
    _
  $region5: #{spectral_filtering_forward_planar.1} parent=0 // pred_fallthru
    _
  // Predicated region
  $region6: #{spectral_filtering_forward_planar.1} parent=0 // pred_check
    _
  $region7: #{spectral_filtering_forward_planar.1} parent=0 // pred_check_branch
    %18 = sbr.rel (0) target = $region9
  $region8: #{spectral_filtering_forward_planar.1} parent=0 // pred_region
    _
  $region9: #{spectral_filtering_forward_planar.1} parent=0 // pred_fallthru
    _
  // Predicated region
  $region10: #{spectral_filtering_forward_planar.1} parent=0 // pred_check
    _
  $region11: #{spectral_filtering_forward_planar.1} parent=0 // pred_check_branch
    %20 = sbr.rel (0) target = $region13
  $region12: #{spectral_filtering_forward_planar.1} parent=0 // pred_region
    _
  $region13: #{spectral_filtering_forward_planar.1} parent=0 // pred_fallthru
    _
  // Predicated region
  $region14: #{spectral_filtering_forward_planar.1} parent=0 // pred_check
    _
  $region15: #{spectral_filtering_forward_planar.1} parent=0 // pred_check_branch
    %22 = sbr.rel (0) target = $region17
  $region16: #{spectral_filtering_forward_planar.1} parent=0 // pred_region
    _
  $region17: #{spectral_filtering_forward_planar.1} parent=0 // pred_fallthru
    _
  // Predicated region
  $region18: #{spectral_filtering_forward_planar.1} parent=0 // pred_check
    _
  $region19: #{spectral_filtering_forward_planar.1} parent=0 // pred_check_branch
    %24 = sbr.rel (0) target = $region21
  $region20: #{spectral_filtering_forward_planar.1} parent=0 // pred_region
    _
  $region21: #{spectral_filtering_forward_planar.1} parent=0 // pred_fallthru
    _
  // Predicated region
  $region22: #{spectral_filtering_forward_planar.1} parent=0 // pred_check
    _
  $region23: #{spectral_filtering_forward_planar.1} parent=0 // pred_check_branch
    %26 = sbr.rel (0) target = $region25
  $region24: #{spectral_filtering_forward_planar.1} parent=0 // pred_region
    _
  $region25: #{spectral_filtering_forward_planar.1} parent=0 // pred_fallthru
    _
  // Predicated region
  $region26: #{spectral_filtering_forward_planar.1} parent=0 // pred_check
    _
  $region27: #{spectral_filtering_forward_planar.1} parent=0 // pred_check_branch
    %28 = sbr.rel (0) target = $region29
  $region28: #{spectral_filtering_forward_planar.1} parent=0 // pred_region
    _
  $region29: #{spectral_filtering_forward_planar.1} parent=0 // pred_fallthru
    _
  // Predicated region
  $region30: #{spectral_filtering_forward_planar.1} parent=0 // pred_check
    _
  $region31: #{spectral_filtering_forward_planar.1} parent=0 // pred_check_branch
    %30 = sbr.rel (0) target = $region33
  $region32: #{spectral_filtering_forward_planar.1} parent=0 // pred_region
    _
  $region33: #{spectral_filtering_forward_planar.1} parent=0 // pred_fallthru
    _
  %v31 = vld [vmem:[%s0] sm:$0xff]
  %v32 = vld [vmem:[%s0 + $0x8] sm:$0x1]
  %v33 = vld [vmem:[%s1] sm:$0xff]
  %v34 = vld [vmem:[%s1 + $0x8] sm:$0x1]
  %v35 = vld [vmem:[%s2] sm:$0xff]
  %v36 = vld [vmem:[%s2 + $0x8] sm:$0xff]
  %v37 = vld [vmem:[%s2 + $0x10] sm:$0xff]
  %v38 = vld [vmem:[%s2 + $0x18] sm:$0xff]
  %v39 = vld [vmem:[%s2 + $0x20] sm:$0xff]
  %v40 = vld [vmem:[%s2 + $0x28] sm:$0xff]
  %v41 = vld [vmem:[%s2 + $0x30] sm:$0xff]
  %v42 = vld [vmem:[%s2 + $0x38] sm:$0xff]
  %v43 = vld [vmem:[%s3] sm:$0xff]
  %v44 = vld [vmem:[%s3 + $0x8] sm:$0xff]
  %v45 = vld [vmem:[%s3 + $0x10] sm:$0xff]
  %v46 = vld [vmem:[%s3 + $0x18] sm:$0xff]
  %v47 = vld [vmem:[%s3 + $0x20] sm:$0xff]
  %v48 = vld [vmem:[%s3 + $0x28] sm:$0xff]
  %v49 = vld [vmem:[%s3 + $0x30] sm:$0xff]
  %v50 = vld [vmem:[%s3 + $0x38] sm:$0xff]
  %52 = vset.pattern.permute.xlu0 0
  %53 = vperm.xlu0 %52, %v43
  %v54 = vpop.permute.xlu0 %53
  %57 = vset.pattern.permute.xlu0 0
  %58 = vperm.xlu0 %57, %v44
  %v59 = vpop.permute.xlu0 %58
  %62 = vset.pattern.permute.xlu0 0
  %63 = vperm.xlu0 %62, %v45
  %v64 = vpop.permute.xlu0 %63
  %67 = vset.pattern.permute.xlu0 0
  %68 = vperm.xlu0 %67, %v46
  %v69 = vpop.permute.xlu0 %68
  %72 = vset.pattern.permute.xlu0 0
  %73 = vperm.xlu0 %72, %v47
  %v74 = vpop.permute.xlu0 %73
  %77 = vset.pattern.permute.xlu0 0
  %78 = vperm.xlu0 %77, %v48
  %v79 = vpop.permute.xlu0 %78
  %82 = vset.pattern.permute.xlu0 0
  %83 = vperm.xlu0 %82, %v49
  %v84 = vpop.permute.xlu0 %83
  %87 = vset.pattern.permute.xlu0 0
  %88 = vperm.xlu0 %87, %v50
  %v89 = vpop.permute.xlu0 %88
  %vm91 = vcmask 72704
  %v93 = vsel %vm91, %v35, 0
  %v96 = vsel %vm91, %v36, 0
  %v99 = vsel %vm91, %v37, 0
  %v102 = vsel %vm91, %v38, 0
  %v105 = vsel %vm91, %v39, 0
  %v108 = vsel %vm91, %v40, 0
  %v111 = vsel %vm91, %v41, 0
  %v114 = vsel %vm91, %v42, 0
  %vm116 = vcmask 1040384
  %v118 = vsel %vm116, %v32, 0
  %120 = vmatprep.subr.mxu0 0.0
  %121 = vmatpush1.msra.mxu0 0.0
  %122 = vmatprep.subr.mxu0 0.0
  %123 = vmatpush1.msra.mxu0 0.0
  %124 = vmatprep.subr.mxu0 0.0
  %125 = vmatpush1.msra.mxu0 0.0
  %126 = vmatprep.subr.mxu0 0.0
  %127 = vmatpush1.msra.mxu0 0.0
  %128 = vmatprep.subr.mxu0 0.0
  %129 = vmatpush1.msra.mxu0 0.0
  %130 = vmatprep.subr.mxu0 0.0
  %131 = vmatpush1.msra.mxu0 0.0
  %132 = vmatprep.subr.mxu0 0.0
  %133 = vmatpush1.msra.mxu0 0.0
  %134 = vmatprep.subr.mxu0 0.0
  %135 = vmatpush1.msra.mxu0 0.0
  %136 = vmatprep.subr.mxu0 0.0
  %137 = vmatpush1.msra.mxu0 0.0
  %138 = vmatprep.subr.mxu0 0.0
  %139 = vmatpush1.msra.mxu0 0.0
  %140 = vmatprep.subr.mxu0 0.0
  %141 = vmatpush1.msra.mxu0 0.0
  %142 = vmatprep.subr.mxu0 0.0
  %143 = vmatpush1.msra.mxu0 0.0
  %144 = vmatprep.subr.mxu0 0.0
  %145 = vmatpush1.msra.mxu0 0.0
  %146 = vmatprep.subr.mxu0 0.0
  %147 = vmatpush1.msra.mxu0 0.0
  %148 = vmatprep.subr.mxu0 0.0
  %149 = vmatpush1.msra.mxu0 %v118
  %150 = vmatprep.subr.mxu0 0.0
  %151 = vmatpush1.msra.mxu0 %v31
  %152 = vmatprep.subr.mxu0 0.0
  %153 = vmatpush2.msra.mxu0 0.0
  %154 = vmatprep.subr.mxu0 0.0
  %155 = vmatpush2.msra.mxu0 0.0
  %156 = vmatprep.subr.mxu0 0.0
  %157 = vmatpush2.msra.mxu0 0.0
  %158 = vmatprep.subr.mxu0 0.0
  %159 = vmatpush2.msra.mxu0 0.0
  %160 = vmatprep.subr.mxu0 0.0
  %161 = vmatpush2.msra.mxu0 0.0
  %162 = vmatprep.subr.mxu0 0.0
  %163 = vmatpush2.msra.mxu0 0.0
  %164 = vmatprep.subr.mxu0 0.0
  %165 = vmatpush2.msra.mxu0 0.0
  %166 = vmatprep.subr.mxu0 0.0
  %167 = vmatpush2.msra.mxu0 0.0
  %168 = vmatprep.subr.mxu0 0.0
  %169 = vmatpush2.msra.mxu0 0.0
  %170 = vmatprep.subr.mxu0 0.0
  %171 = vmatpush2.msra.mxu0 0.0
  %172 = vmatprep.subr.mxu0 0.0
  %173 = vmatpush2.msra.mxu0 0.0
  %174 = vmatprep.subr.mxu0 0.0
  %175 = vmatpush2.msra.mxu0 0.0
  %176 = vmatprep.subr.mxu0 0.0
  %177 = vmatpush2.msra.mxu0 0.0
  %178 = vmatprep.subr.mxu0 0.0
  %179 = vmatpush2.msra.mxu0 0.0
  %180 = vmatprep.subr.mxu0 0.0
  %181 = vmatpush2.msra.mxu0 0.0
  %182 = vmatprep.subr.mxu0 0.0
  %183 = vmatpush2.msra.mxu0 0.0
  %184 = vmatprep.mubr.f32.mxu0 0.0
  %185 = vmatmul.mubr.f32.gmra.mxu0 %v93
  %v186 = vpop.f32.mrf.mxu0
  %v187 = vadd.f32 %v54, %v186
  %v188 = vpop.f32.mrf.mxu0
  %189 = vmatprep.mubr.f32.mxu0 0.0
  %190 = vmatmul.mubr.f32.gmra.mxu0 %v96
  %v191 = vpop.f32.mrf.mxu0
  %v192 = vadd.f32 %v59, %v191
  %v193 = vpop.f32.mrf.mxu0
  %194 = vmatprep.mubr.f32.mxu0 0.0
  %195 = vmatmul.mubr.f32.gmra.mxu0 %v99
  %v196 = vpop.f32.mrf.mxu0
  %v197 = vadd.f32 %v64, %v196
  %v198 = vpop.f32.mrf.mxu0
  %199 = vmatprep.mubr.f32.mxu0 0.0
  %200 = vmatmul.mubr.f32.gmra.mxu0 %v102
  %v201 = vpop.f32.mrf.mxu0
  %v202 = vadd.f32 %v69, %v201
  %v203 = vpop.f32.mrf.mxu0
  %204 = vmatprep.mubr.f32.mxu0 0.0
  %205 = vmatmul.mubr.f32.gmra.mxu0 %v105
  %v206 = vpop.f32.mrf.mxu0
  %v207 = vadd.f32 %v74, %v206
  %v208 = vpop.f32.mrf.mxu0
  %209 = vmatprep.mubr.f32.mxu0 0.0
  %210 = vmatmul.mubr.f32.gmra.mxu0 %v108
  %v211 = vpop.f32.mrf.mxu0
  %v212 = vadd.f32 %v79, %v211
  %v213 = vpop.f32.mrf.mxu0
  %214 = vmatprep.mubr.f32.mxu0 0.0
  %215 = vmatmul.mubr.f32.gmra.mxu0 %v111
  %v216 = vpop.f32.mrf.mxu0
  %v217 = vadd.f32 %v84, %v216
  %v218 = vpop.f32.mrf.mxu0
  %219 = vmatprep.mubr.f32.mxu0 0.0
  %220 = vmatmul.mubr.f32.gmra.mxu0 %v114
  %v221 = vpop.f32.mrf.mxu0
  %v222 = vadd.f32 %v89, %v221
  %v223 = vpop.f32.mrf.mxu0
  %224 = vdwg.mxu0
  %v225 = vtanh.pop %v187
  %v226 = vtanh.pop %v192
  %v227 = vtanh.pop %v197
  %v228 = vtanh.pop %v202
  %v229 = vtanh.pop %v207
  %v230 = vtanh.pop %v212
  %v231 = vtanh.pop %v217
  %v232 = vtanh.pop %v222
  %v233 = vld [vmem:[%s4] sm:$0xff]
  %v234 = vld [vmem:[%s4 + $0x8] sm:$0xff]
  %v235 = vld [vmem:[%s4 + $0x10] sm:$0xff]
  %v236 = vld [vmem:[%s4 + $0x18] sm:$0xff]
  %v237 = vld [vmem:[%s4 + $0x20] sm:$0xff]
  %v238 = vld [vmem:[%s4 + $0x28] sm:$0xff]
  %v239 = vld [vmem:[%s4 + $0x30] sm:$0xff]
  %v240 = vld [vmem:[%s4 + $0x38] sm:$0xff]
  %v241 = vld [vmem:[%s5] sm:$0xff]
  %v242 = vld [vmem:[%s5 + $0x8] sm:$0xff]
  %v243 = vld [vmem:[%s5 + $0x10] sm:$0xff]
  %v244 = vld [vmem:[%s5 + $0x18] sm:$0xff]
  %v245 = vld [vmem:[%s5 + $0x20] sm:$0xff]
  %v246 = vld [vmem:[%s5 + $0x28] sm:$0xff]
  %v247 = vld [vmem:[%s5 + $0x30] sm:$0xff]
  %v248 = vld [vmem:[%s5 + $0x38] sm:$0xff]
  %250 = vset.pattern.permute.xlu0 0
  %251 = vperm.xlu0 %250, %v241
  %v252 = vpop.permute.xlu0 %251
  %255 = vset.pattern.permute.xlu0 0
  %256 = vperm.xlu0 %255, %v242
  %v257 = vpop.permute.xlu0 %256
  %260 = vset.pattern.permute.xlu0 0
  %261 = vperm.xlu0 %260, %v243
  %v262 = vpop.permute.xlu0 %261
  %265 = vset.pattern.permute.xlu0 0
  %266 = vperm.xlu0 %265, %v244
  %v267 = vpop.permute.xlu0 %266
  %270 = vset.pattern.permute.xlu0 0
  %271 = vperm.xlu0 %270, %v245
  %v272 = vpop.permute.xlu0 %271
  %275 = vset.pattern.permute.xlu0 0
  %276 = vperm.xlu0 %275, %v246
  %v277 = vpop.permute.xlu0 %276
  %280 = vset.pattern.permute.xlu0 0
  %281 = vperm.xlu0 %280, %v247
  %v282 = vpop.permute.xlu0 %281
  %285 = vset.pattern.permute.xlu0 0
  %286 = vperm.xlu0 %285, %v248
  %v287 = vpop.permute.xlu0 %286
  %vm289 = vcmask 523264
  %v291 = vsel %vm289, %v233, 0
  %v294 = vsel %vm289, %v234, 0
  %v297 = vsel %vm289, %v235, 0
  %v300 = vsel %vm289, %v236, 0
  %v303 = vsel %vm289, %v237, 0
  %v306 = vsel %vm289, %v238, 0
  %v309 = vsel %vm289, %v239, 0
  %v312 = vsel %vm289, %v240, 0
  %314 = vmatprep.subr.mxu0 0.0
  %315 = vmatpush1.msra.mxu0 0.0
  %316 = vmatprep.subr.mxu0 0.0
  %317 = vmatpush1.msra.mxu0 0.0
  %318 = vmatprep.subr.mxu0 0.0
  %319 = vmatpush1.msra.mxu0 0.0
  %320 = vmatprep.subr.mxu0 0.0
  %321 = vmatpush1.msra.mxu0 0.0
  %322 = vmatprep.subr.mxu0 0.0
  %323 = vmatpush1.msra.mxu0 0.0
  %324 = vmatprep.subr.mxu0 0.0
  %325 = vmatpush1.msra.mxu0 0.0
  %326 = vmatprep.subr.mxu0 0.0
  %327 = vmatpush1.msra.mxu0 0.0
  %328 = vmatprep.subr.mxu0 0.0
  %329 = vmatpush1.msra.mxu0 0.0
  %330 = vmatprep.subr.mxu0 0.0
  %331 = vmatpush1.msra.mxu0 %v232
  %332 = vmatprep.subr.mxu0 0.0
  %333 = vmatpush1.msra.mxu0 %v231
  %334 = vmatprep.subr.mxu0 0.0
  %335 = vmatpush1.msra.mxu0 %v230
  %336 = vmatprep.subr.mxu0 0.0
  %337 = vmatpush1.msra.mxu0 %v229
  %338 = vmatprep.subr.mxu0 0.0
  %339 = vmatpush1.msra.mxu0 %v228
  %340 = vmatprep.subr.mxu0 0.0
  %341 = vmatpush1.msra.mxu0 %v227
  %342 = vmatprep.subr.mxu0 0.0
  %343 = vmatpush1.msra.mxu0 %v226
  %344 = vmatprep.subr.mxu0 0.0
  %345 = vmatpush1.msra.mxu0 %v225
  %346 = vmatprep.subr.mxu0 0.0
  %347 = vmatpush2.msra.mxu0 0.0
  %348 = vmatprep.subr.mxu0 0.0
  %349 = vmatpush2.msra.mxu0 0.0
  %350 = vmatprep.subr.mxu0 0.0
  %351 = vmatpush2.msra.mxu0 0.0
  %352 = vmatprep.subr.mxu0 0.0
  %353 = vmatpush2.msra.mxu0 0.0
  %354 = vmatprep.subr.mxu0 0.0
  %355 = vmatpush2.msra.mxu0 0.0
  %356 = vmatprep.subr.mxu0 0.0
  %357 = vmatpush2.msra.mxu0 0.0
  %358 = vmatprep.subr.mxu0 0.0
  %359 = vmatpush2.msra.mxu0 0.0
  %360 = vmatprep.subr.mxu0 0.0
  %361 = vmatpush2.msra.mxu0 0.0
  %362 = vmatprep.subr.mxu0 0.0
  %363 = vmatpush2.msra.mxu0 0.0
  %364 = vmatprep.subr.mxu0 0.0
  %365 = vmatpush2.msra.mxu0 0.0
  %366 = vmatprep.subr.mxu0 0.0
  %367 = vmatpush2.msra.mxu0 0.0
  %368 = vmatprep.subr.mxu0 0.0
  %369 = vmatpush2.msra.mxu0 0.0
  %370 = vmatprep.subr.mxu0 0.0
  %371 = vmatpush2.msra.mxu0 0.0
  %372 = vmatprep.subr.mxu0 0.0
  %373 = vmatpush2.msra.mxu0 0.0
  %374 = vmatprep.subr.mxu0 0.0
  %375 = vmatpush2.msra.mxu0 0.0
  %376 = vmatprep.subr.mxu0 0.0
  %377 = vmatpush2.msra.mxu0 0.0
  %378 = vmatprep.mubr.f32.mxu0 0.0
  %379 = vmatmul.mubr.f32.gmra.mxu0 %v291
  %v380 = vpop.f32.mrf.mxu0
  %v381 = vadd.f32 %v252, %v380
  %v382 = vpop.f32.mrf.mxu0
  %383 = vmatprep.mubr.f32.mxu0 0.0
  %384 = vmatmul.mubr.f32.gmra.mxu0 %v294
  %v385 = vpop.f32.mrf.mxu0
  %v386 = vadd.f32 %v257, %v385
  %v387 = vpop.f32.mrf.mxu0
  %388 = vmatprep.mubr.f32.mxu0 0.0
  %389 = vmatmul.mubr.f32.gmra.mxu0 %v297
  %v390 = vpop.f32.mrf.mxu0
  %v391 = vadd.f32 %v262, %v390
  %v392 = vpop.f32.mrf.mxu0
  %393 = vmatprep.mubr.f32.mxu0 0.0
  %394 = vmatmul.mubr.f32.gmra.mxu0 %v300
  %v395 = vpop.f32.mrf.mxu0
  %v396 = vadd.f32 %v267, %v395
  %v397 = vpop.f32.mrf.mxu0
  %398 = vmatprep.mubr.f32.mxu0 0.0
  %399 = vmatmul.mubr.f32.gmra.mxu0 %v303
  %v400 = vpop.f32.mrf.mxu0
  %v401 = vadd.f32 %v272, %v400
  %v402 = vpop.f32.mrf.mxu0
  %403 = vmatprep.mubr.f32.mxu0 0.0
  %404 = vmatmul.mubr.f32.gmra.mxu0 %v306
  %v405 = vpop.f32.mrf.mxu0
  %v406 = vadd.f32 %v277, %v405
  %v407 = vpop.f32.mrf.mxu0
  %408 = vmatprep.mubr.f32.mxu0 0.0
  %409 = vmatmul.mubr.f32.gmra.mxu0 %v309
  %v410 = vpop.f32.mrf.mxu0
  %v411 = vadd.f32 %v282, %v410
  %v412 = vpop.f32.mrf.mxu0
  %413 = vmatprep.mubr.f32.mxu0 0.0
  %414 = vmatmul.mubr.f32.gmra.mxu0 %v312
  %v415 = vpop.f32.mrf.mxu0
  %v416 = vadd.f32 %v287, %v415
  %v417 = vpop.f32.mrf.mxu0
  %418 = vdwg.mxu0
  %v419 = vtanh.pop %v381
  %v420 = vtanh.pop %v386
  %v421 = vtanh.pop %v391
  %v422 = vtanh.pop %v396
  %v423 = vtanh.pop %v401
  %v424 = vtanh.pop %v406
  %v425 = vtanh.pop %v411
  %v426 = vtanh.pop %v416
  %v427 = vld [vmem:[%s6] sm:$0xff]
  %v428 = vld [vmem:[%s6 + $0x8] sm:$0xff]
  %v429 = vld [vmem:[%s6 + $0x10] sm:$0xff]
  %v430 = vld [vmem:[%s6 + $0x18] sm:$0xff]
  %v431 = vld [vmem:[%s7] sm:$0xff]
  %v432 = vld [vmem:[%s7 + $0x8] sm:$0xff]
  %v433 = vld [vmem:[%s7 + $0x10] sm:$0xff]
  %v434 = vld [vmem:[%s7 + $0x18] sm:$0xff]
  %436 = vset.pattern.permute.xlu0 0
  %437 = vperm.xlu0 %436, %v431
  %v438 = vpop.permute.xlu0 %437
  %441 = vset.pattern.permute.xlu0 0
  %442 = vperm.xlu0 %441, %v432
  %v443 = vpop.permute.xlu0 %442
  %446 = vset.pattern.permute.xlu0 0
  %447 = vperm.xlu0 %446, %v433
  %v448 = vpop.permute.xlu0 %447
  %451 = vset.pattern.permute.xlu0 0
  %452 = vperm.xlu0 %451, %v434
  %v453 = vpop.permute.xlu0 %452
  %v456 = vsel %vm289, %v427, 0
  %v459 = vsel %vm289, %v428, 0
  %v462 = vsel %vm289, %v429, 0
  %v465 = vsel %vm289, %v430, 0
  %467 = vmatprep.subr.mxu0 0.0
  %468 = vmatpush1.msra.mxu0 0.0
  %469 = vmatprep.subr.mxu0 0.0
  %470 = vmatpush1.msra.mxu0 0.0
  %471 = vmatprep.subr.mxu0 0.0
  %472 = vmatpush1.msra.mxu0 0.0
  %473 = vmatprep.subr.mxu0 0.0
  %474 = vmatpush1.msra.mxu0 0.0
  %475 = vmatprep.subr.mxu0 0.0
  %476 = vmatpush1.msra.mxu0 0.0
  %477 = vmatprep.subr.mxu0 0.0
  %478 = vmatpush1.msra.mxu0 0.0
  %479 = vmatprep.subr.mxu0 0.0
  %480 = vmatpush1.msra.mxu0 0.0
  %481 = vmatprep.subr.mxu0 0.0
  %482 = vmatpush1.msra.mxu0 0.0
  %483 = vmatprep.subr.mxu0 0.0
  %484 = vmatpush1.msra.mxu0 %v426
  %485 = vmatprep.subr.mxu0 0.0
  %486 = vmatpush1.msra.mxu0 %v425
  %487 = vmatprep.subr.mxu0 0.0
  %488 = vmatpush1.msra.mxu0 %v424
  %489 = vmatprep.subr.mxu0 0.0
  %490 = vmatpush1.msra.mxu0 %v423
  %491 = vmatprep.subr.mxu0 0.0
  %492 = vmatpush1.msra.mxu0 %v422
  %493 = vmatprep.subr.mxu0 0.0
  %494 = vmatpush1.msra.mxu0 %v421
  %495 = vmatprep.subr.mxu0 0.0
  %496 = vmatpush1.msra.mxu0 %v420
  %497 = vmatprep.subr.mxu0 0.0
  %498 = vmatpush1.msra.mxu0 %v419
  %499 = vmatprep.subr.mxu0 0.0
  %500 = vmatpush2.msra.mxu0 0.0
  %501 = vmatprep.subr.mxu0 0.0
  %502 = vmatpush2.msra.mxu0 0.0
  %503 = vmatprep.subr.mxu0 0.0
  %504 = vmatpush2.msra.mxu0 0.0
  %505 = vmatprep.subr.mxu0 0.0
  %506 = vmatpush2.msra.mxu0 0.0
  %507 = vmatprep.subr.mxu0 0.0
  %508 = vmatpush2.msra.mxu0 0.0
  %509 = vmatprep.subr.mxu0 0.0
  %510 = vmatpush2.msra.mxu0 0.0
  %511 = vmatprep.subr.mxu0 0.0
  %512 = vmatpush2.msra.mxu0 0.0
  %513 = vmatprep.subr.mxu0 0.0
  %514 = vmatpush2.msra.mxu0 0.0
  %515 = vmatprep.subr.mxu0 0.0
  %516 = vmatpush2.msra.mxu0 0.0
  %517 = vmatprep.subr.mxu0 0.0
  %518 = vmatpush2.msra.mxu0 0.0
  %519 = vmatprep.subr.mxu0 0.0
  %520 = vmatpush2.msra.mxu0 0.0
  %521 = vmatprep.subr.mxu0 0.0
  %522 = vmatpush2.msra.mxu0 0.0
  %523 = vmatprep.subr.mxu0 0.0
  %524 = vmatpush2.msra.mxu0 0.0
  %525 = vmatprep.subr.mxu0 0.0
  %526 = vmatpush2.msra.mxu0 0.0
  %527 = vmatprep.subr.mxu0 0.0
  %528 = vmatpush2.msra.mxu0 0.0
  %529 = vmatprep.subr.mxu0 0.0
  %530 = vmatpush2.msra.mxu0 0.0
  %531 = vmatprep.mubr.f32.mxu0 0.0
  %532 = vmatmul.mubr.f32.gmra.mxu0 %v456
  %v533 = vpop.f32.mrf.mxu0
  %v534 = vadd.f32 %v438, %v533
  %v535 = vpop.f32.mrf.mxu0
  %536 = vmatprep.mubr.f32.mxu0 0.0
  %537 = vmatmul.mubr.f32.gmra.mxu0 %v459
  %v538 = vpop.f32.mrf.mxu0
  %v539 = vadd.f32 %v443, %v538
  %v540 = vpop.f32.mrf.mxu0
  %541 = vmatprep.mubr.f32.mxu0 0.0
  %542 = vmatmul.mubr.f32.gmra.mxu0 %v462
  %v543 = vpop.f32.mrf.mxu0
  %v544 = vadd.f32 %v448, %v543
  %v545 = vpop.f32.mrf.mxu0
  %546 = vmatprep.mubr.f32.mxu0 0.0
  %547 = vmatmul.mubr.f32.gmra.mxu0 %v465
  %v548 = vpop.f32.mrf.mxu0
  %v549 = vadd.f32 %v453, %v548
  %v550 = vpop.f32.mrf.mxu0
  %551 = vdwg.mxu0
  %v552 = vtanh.pop %v534
  %v553 = vtanh.pop %v539
  %v554 = vtanh.pop %v544
  %v555 = vtanh.pop %v549
  %v556 = vmul.f32 %v552, 1.442695
  %v557 = vpow.pop %v556
  %v558 = vmul.f32 %v553, 1.442695
  %v559 = vpow.pop %v558
  %v560 = vadd.f32 %v557, 1.0
  %v561 = vlog2.pop %v560
  %v562 = vmul.f32 %v561, 0.6931472
  %v563 = vmul.f32 -0.5, %v557
  %v564 = vadd.f32 %v563, 1.0
  %v565 = vmul.f32 %v564, %v557
  %v566 = vand.u32 2147483647, %v557
  %vm567 = vcmp.lt.f32.partialorder %v566, 0.0004427343
  %v568 = vsel %vm567, %v565, %v562
  %v569 = vadd.f32 %v559, 1.0
  %v570 = vlog2.pop %v569
  %v571 = vmul.f32 %v570, 0.6931472
  %v572 = vmul.f32 -0.5, %v559
  %v573 = vadd.f32 %v572, 1.0
  %v574 = vmul.f32 %v573, %v559
  %v575 = vand.u32 2147483647, %v559
  %vm576 = vcmp.lt.f32.partialorder %v575, 0.0004427343
  %v577 = vsel %vm576, %v574, %v571
  %v578 = vmul.f32 %v568, %v33
  %v579 = vmul.f32 %v577, %v34
  %v580 = vadd.f32 %v578, %v554
  %v581 = vadd.f32 %v579, %v555
  %582 = vst [vmem:[%s8] sm:$0xff] %v580
  %583 = vst [vmem:[%s8 + $0x8] sm:$0x1] %v581
  %v584 = vlog2.pop %v568
  %v585 = vmul.f32 %v584, 0.6931472
  %v586 = vlog2.pop %v577
  %v587 = vmul.f32 %v586, 0.6931472
  %v588 = vsel %vm116, %v587, 0.0
  %v589 = vadd.f32 %v585, %v588
  %v590 = vrot.slane %v589, 4
  %v591 = vadd.f32 %v589, %v590
  %v592 = vrot.slane %v591, 2
  %v593 = vadd.f32 %v591, %v592
  %v594 = vrot.slane %v593, 1
  %v595 = vadd.f32 %v593, %v594
  %596 = vst [vmem:[%s9] sm:$0x1] %v595
  // Predicated region
  $region34: #{spectral_filtering_forward_planar.1} parent=0 // pred_check
    _
  $region35: #{spectral_filtering_forward_planar.1} parent=0 // pred_check_branch
    %598 = sbr.rel (0) target = $region37
  $region36: #{spectral_filtering_forward_planar.1} parent=0 // pred_region
    _
  $region37: #{spectral_filtering_forward_planar.1} parent=0 // pred_fallthru
    _
  // Predicated region
  $region38: #{spectral_filtering_forward_planar.1} parent=0 // pred_check
    _
  $region39: #{spectral_filtering_forward_planar.1} parent=0 // pred_check_branch
    %600 = sbr.rel (0) target = $region41
  $region40: #{spectral_filtering_forward_planar.1} parent=0 // pred_region
    _
  $region41: #{spectral_filtering_forward_planar.1} parent=0 // pred_fallthru
    _
  // Predicated region
  $region42: #{spectral_filtering_forward_planar.1} parent=0 // pred_check
    _
  $region43: #{spectral_filtering_forward_planar.1} parent=0 // pred_check_branch
    %602 = sbr.rel (0) target = $region45
  $region44: #{spectral_filtering_forward_planar.1} parent=0 // pred_region
    _
  $region45: #{spectral_filtering_forward_planar.1} parent=0 // pred_fallthru
    _
  // Predicated region
  $region46: #{spectral_filtering_forward_planar.1} parent=0 // pred_check
    _
  $region47: #{spectral_filtering_forward_planar.1} parent=0 // pred_check_branch
    %604 = sbr.rel (0) target = $region49
  $region48: #{spectral_filtering_forward_planar.1} parent=0 // pred_region
    _
  $region49: #{spectral_filtering_forward_planar.1} parent=0 // pred_fallthru
    _

</llo_original>
